<compile_context>
chip_gen: v5e
topology: v5e:2x2
jax: 0.10.0
libtpu: 0.0.40
codegen_flags: <defaults>
</compile_context>

<pallas_src>
import functools

import jax
import jax.numpy as jnp
from jax.experimental import pallas as pl
from jax.experimental.pallas import tpu as pltpu


def _pad128(n):
    return ((n + 127) // 128) * 128


# ---------------------------------------------------------------------------
# Kernel body: 4 lane-dense MXU matmuls (bf16 operands, f32 accumulation).
# Biases of conv2/fc1/fc3 are already folded into the weight matrices via a
# constant-one lane; only conv1's bias is an explicit (1, CFp) f32 add.
# ---------------------------------------------------------------------------
def coev_kernel(x_ref, w1_ref, w2_ref, wf1_ref, wf3_ref, b1_ref, out_ref):
    f32 = jnp.float32
    # conv1 (block-diagonal) + bias + relu : (tb, CRp) @ (CRp, CFp)
    h1 = jnp.maximum(
        jnp.dot(x_ref[...], w1_ref[...], preferred_element_type=f32)
        + b1_ref[...], 0.0)
    # conv2 + relu (bias folded into row CF) : (tb, CFp) @ (CFp, Fp)
    h2 = jnp.maximum(
        jnp.dot(h1.astype(w2_ref.dtype), w2_ref[...],
                preferred_element_type=f32), 0.0)
    # fc1 + relu (bias folded into row F) : (tb, Fp) @ (Fp, Hp)
    h3 = jnp.maximum(
        jnp.dot(h2.astype(wf1_ref.dtype), wf1_ref[...],
                preferred_element_type=f32), 0.0)
    # TODO(synk): nn.Dropout(p=0.25) is identity at inference; training-mode
    # masking is intentionally omitted.
    # fc3 (bias folded into row 100), lane-padded to 128; wrapper slices [:, :2]
    out_ref[...] = jnp.dot(h3.astype(wf3_ref.dtype), wf3_ref[...],
                           preferred_element_type=f32)


# ---------------------------------------------------------------------------
# One-time (load-time) weight preprocessing.  Nothing here runs per call.
# ---------------------------------------------------------------------------
def prepare_params(params, compute_dtype=jnp.bfloat16):
    """Relayout torch-format params into kernel operands (done once)."""
    w1, b1, w2, b2, wf1, bf1, wf3, bf3 = params
    F_ = w1.shape[0]
    R = w1.shape[2]
    C = w2.shape[3]
    CR, CF = C * R, C * F_

    CRp = _pad128(CR)
    CFp = _pad128(CF + 1)      # +1: lane CF carries a constant 1 (bias-ones lane)
    Fp = _pad128(F_ + 1)       # lane F_ of h2 carries the constant 1
    Hp = _pad128(100 + 1)      # lane 100 of h3 carries the constant 1
    NO = 128                   # lane-padded fc3 output width (sliced to 2 later)

    # conv1 as block-diagonal matmul on the ROW-MAJOR flattened x (lane r*C+c):
    #   W1bd[r*C + c, c*F + g] = w1[g, 0, r, 0]
    w1_rf = jnp.transpose(w1[:, 0, :, 0], (1, 0))                       # (R, F)
    w1bd = jnp.einsum('cd,rg->rcdg', jnp.eye(C, dtype=jnp.float32), w1_rf)
    w1bd = w1bd.reshape(CR, CF)
    w1bd = jnp.pad(w1bd, ((0, CRp - CR), (0, CFp - CF)))                # (CRp, CFp)

    # conv1 bias tiled over c; lane CF is set to 1.0 -> after ReLU h1[:,CF]==1,
    # which multiplies the bias rows folded into the downstream weights.
    b1row = jnp.concatenate([
        jnp.tile(b1, C),
        jnp.ones((1,), jnp.float32),
        jnp.zeros((CFp - CF - 1,), jnp.float32),
    ]).reshape(1, CFp).astype(jnp.float32)

    # conv2: row k = c*F + g -> w2[f, g, 0, c]; b2 folded into row CF;
    # column F_ re-creates the constant-one lane for the next layer.
    w2m = jnp.transpose(w2[:, :, 0, :], (2, 1, 0)).reshape(CF, F_)      # (CF, F)
    w2p = jnp.zeros((CFp, Fp), jnp.float32)
    w2p = w2p.at[:CF, :F_].set(w2m)
    w2p = w2p.at[CF, :F_].set(b2)
    w2p = w2p.at[CF, F_].set(1.0)

    # fc1: bf1 folded into row F_; column 100 re-creates the one-lane.
    wf1p = jnp.zeros((Fp, Hp), jnp.float32)
    wf1p = wf1p.at[:F_, :100].set(wf1.T)
    wf1p = wf1p.at[F_, :100].set(bf1)
    wf1p = wf1p.at[F_, 100].set(1.0)

    # fc3: bf3 folded into row 100; output lane-padded to 128.
    wf3p = jnp.zeros((Hp, NO), jnp.float32)
    wf3p = wf3p.at[:100, :2].set(wf3.T)
    wf3p = wf3p.at[100, :2].set(bf3)

    w1bd, w2p, wf1p, wf3p = (a.astype(compute_dtype)
                             for a in (w1bd, w2p, wf1p, wf3p))
    return (w1bd, w2p, wf1p, wf3p, b1row)


def _pick_tb(B):
    # Small batch: single grid step -> no per-step overhead and no duplicated
    # weight DMA across v7x's two cores (the 4-matmul chain is latency-bound
    # at small M, so splitting tiny batches gains nothing).
    if B <= 256:
        return B
    # Large batch: 128-256-row tiles fill the MXU M dim, amortize the ~0.35us
    # per-step overhead and let BlockSpec double-buffer x/out tiles; the
    # 'parallel' axis is sharded across v7x's two TensorCores.
    for tb in (256, 128, 64, 32, 16, 8):
        if B % tb == 0:
            return tb
    return B


# ---------------------------------------------------------------------------
# Per-call forward: only x relayout + one pallas_call (+ output slice).
# ---------------------------------------------------------------------------
def coev_forward(x, prepared, *, tb=None):
    """x: (B, R, C) float32.  prepared: output of prepare_params()."""
    w1bd, w2p, wf1p, wf3p, b1row = prepared
    B, R, C = x.shape
    CR = R * C
    CRp, CFp = w1bd.shape
    Fp = w2p.shape[1]
    Hp = wf1p.shape[1]
    NO = wf3p.shape[1]
    assert CR <= CRp

    if tb is None:
        tb = _pick_tb(B)
    assert B % tb == 0

    # Row-major flatten (lane index r*C + c) -- NO transpose per call.
    xflat = x.reshape(B, CR)
    if CRp > CR:
        xflat = jnp.pad(xflat, ((0, 0), (0, CRp - CR)))
    xflat = xflat.astype(w1bd.dtype)

    # ---- VMEM budget guard (v7x: 64 MiB physical, 32 MiB scoped default) ----
    bpe = 2  # bf16
    w_bytes = (CRp * CFp + CFp * Fp + Fp * Hp + Hp * NO) * bpe + CFp * 4
    io_bytes = 2 * (tb * CRp * bpe + tb * NO * 4)       # double-buffered tiles
    act_bytes = tb * (CFp + Fp + Hp) * 4                # f32 intermediates
    vmem_est = w_bytes + io_bytes + act_bytes
    assert vmem_est <= 48 * 1024 * 1024, (
        f"VMEM estimate {vmem_est} too large; tile conv1's block-diagonal "
        "weight over column blocks for large COL_SIZE")
    # TODO(synk): for very large COL_SIZE, exploit the block-diagonal structure
    # of w1bd with a grid axis over c-blocks instead of holding it whole in VMEM.
    vmem_limit = int(min(max(2 * vmem_est, 32 * 1024 * 1024), 48 * 1024 * 1024))

    flops = 2 * B * (CRp * CFp + CFp * Fp + Fp * Hp + Hp * NO)
    bytes_accessed = B * CRp * bpe + B * NO * 4 + w_bytes
    cost = pl.CostEstimate(flops=flops, transcendentals=0,
                           bytes_accessed=bytes_accessed)

    grid = (B // tb,)
    out = pl.pallas_call(
        coev_kernel,
        out_shape=jax.ShapeDtypeStruct((B, NO), jnp.float32),
        grid=grid,
        in_specs=[
            pl.BlockSpec((tb, CRp), lambda i: (i, 0)),   # x tile (pipelined)
            pl.BlockSpec((CRp, CFp), lambda i: (0, 0)),  # conv1 block-diag W (resident)
            pl.BlockSpec((CFp, Fp), lambda i: (0, 0)),   # conv2 W (+b2 row)
            pl.BlockSpec((Fp, Hp), lambda i: (0, 0)),    # fc1 W (+bf1 row)
            pl.BlockSpec((Hp, NO), lambda i: (0, 0)),    # fc3 W (+bf3 row)
            pl.BlockSpec((1, CFp), lambda i: (0, 0)),    # conv1 bias row (f32)
        ],
        out_specs=pl.BlockSpec((tb, NO), lambda i: (i, 0)),
        compiler_params=pltpu.CompilerParams(
            dimension_semantics=("parallel",),
            vmem_limit_bytes=vmem_limit),
        cost_estimate=cost,
    )(xflat, w1bd, w2p, wf1p, wf3p, b1row)
    return out[:, :2]


# ---------------------------------------------------------------------------
# Synthetic params + pure-JAX reference (mirrors the PyTorch forward in f32).
# ---------------------------------------------------------------------------
def init_params(key, num_filters, row_size, col_size):
    ks = jax.random.split(key, 8)

    def u(k, shape, fan_in):
        bound = 1.0 / jnp.sqrt(jnp.float32(fan_in))
        return jax.random.uniform(k, shape, jnp.float32, -bound, bound)

    F_ = num_filters
    w1 = u(ks[0], (F_, 1, row_size, 1), 1 * row_size * 1)     # conv1.weight
    b1 = u(ks[1], (F_,), 1 * row_size * 1)                    # conv1.bias
    w2 = u(ks[2], (F_, F_, 1, col_size), F_ * 1 * col_size)   # conv2.weight
    b2 = u(ks[3], (F_,), F_ * 1 * col_size)                   # conv2.bias
    wf1 = u(ks[4], (100, F_), F_)                             # fc1.weight
    bf1 = u(ks[5], (100,), F_)                                # fc1.bias
    wf3 = u(ks[6], (2, 100), 100)                             # fc3.weight
    bf3 = u(ks[7], (2,), 100)                                 # fc3.bias
    return (w1, b1, w2, b2, wf1, bf1, wf3, bf3)


def ref_forward(x, params):
    w1, b1, w2, b2, wf1, bf1, wf3, bf3 = params
    h1 = jnp.einsum('brc,fr->bfc', x, w1[:, 0, :, 0]) + b1[None, :, None]
    h1 = jnp.maximum(h1, 0.0)                              # conv1 + relu -> (B, F, C)
    h2 = jnp.einsum('bgc,fgc->bf', h1, w2[:, :, 0, :]) + b2[None, :]
    h2 = jnp.maximum(h2, 0.0)                              # conv2 + relu -> (B, F)
    h3 = jnp.maximum(h2 @ wf1.T + bf1[None, :], 0.0)       # fc1 + relu
    return h3 @ wf3.T + bf3[None, :]                       # fc3 (dropout = identity)


if __name__ == "__main__":
    B, NUMBER_FILTERS, ROW_SIZE, COL_SIZE = 16, 32, 16, 16

    key = jax.random.PRNGKey(0)
    kx, kp = jax.random.split(key)
    x = jax.random.normal(kx, (B, ROW_SIZE, COL_SIZE), jnp.float32)
    params = init_params(kp, NUMBER_FILTERS, ROW_SIZE, COL_SIZE)

    # One-time weight relayout (load time), then a lightweight jitted forward.
    prepared = prepare_params(params)
    fwd = jax.jit(functools.partial(coev_forward, prepared=prepared))

    out = jax.block_until_ready(fwd(x))

    ref = jax.block_until_ready(ref_forward(x, params))
    assert out.shape == (B, 2)
    assert jnp.allclose(out, ref, rtol=2e-2, atol=2e-2), (
        f"max abs err {jnp.max(jnp.abs(out - ref))}")

    print("KERNEL_OK")
</pallas_src>

<mosaic_0001>
module attributes {stable_mosaic.version = 11 : i64} {
  func.func @coev_kernel(%arg0: i32, %arg1: memref<16x256xbf16, #tpu.memory_space<vmem>>, %arg2: memref<256x640xbf16, #tpu.memory_space<vmem>>, %arg3: memref<640x128xbf16, #tpu.memory_space<vmem>>, %arg4: memref<128x128xbf16, #tpu.memory_space<vmem>>, %arg5: memref<128x128xbf16, #tpu.memory_space<vmem>>, %arg6: memref<1x640xf32, #tpu.memory_space<vmem>>, %arg7: memref<16x128xf32, #tpu.memory_space<vmem>>) attributes {dimension_semantics = [#tpu.dimension_semantics<parallel>], iteration_bounds = array<i64: 1>, scalar_prefetch = 0 : i64, scratch_operands = 0 : i64, tpu.core_type = #tpu.core_type<tc>, window_params = [{transform_indices = @transform_0, window_bounds = array<i64: 16, 256>}, {pipeline_mode = #tpu.pipeline_mode<synchronous>, transform_indices = @transform_1, window_bounds = array<i64: 256, 640>}, {pipeline_mode = #tpu.pipeline_mode<synchronous>, transform_indices = @transform_2, window_bounds = array<i64: 640, 128>}, {pipeline_mode = #tpu.pipeline_mode<synchronous>, transform_indices = @transform_3, window_bounds = array<i64: 128, 128>}, {pipeline_mode = #tpu.pipeline_mode<synchronous>, transform_indices = @transform_4, window_bounds = array<i64: 128, 128>}, {pipeline_mode = #tpu.pipeline_mode<synchronous>, transform_indices = @transform_5, window_bounds = array<i64: 1, 640>}, {transform_indices = @transform_6, window_bounds = array<i64: 16, 128>}]} {
    %c0 = arith.constant 0 : index
    %c0_0 = arith.constant 0 : index
    %0 = vector.load %arg1[%c0, %c0_0] : memref<16x256xbf16, #tpu.memory_space<vmem>>, vector<16x256xbf16>
    %c0_1 = arith.constant 0 : index
    %c0_2 = arith.constant 0 : index
    %1 = vector.load %arg2[%c0_1, %c0_2] : memref<256x640xbf16, #tpu.memory_space<vmem>>, vector<256x640xbf16>
    %cst = arith.constant dense<0.000000e+00> : vector<16x640xf32>
    %2 = tpu.matmul %0, %1, %cst {dimension_numbers = #tpu.dot_dimension_numbers<[1], [0], [0], [1], [0, 0, 1, 1], [], []>} : vector<16x256xbf16>, vector<256x640xbf16>, vector<16x640xf32> -> vector<16x640xf32>
    %c0_3 = arith.constant 0 : index
    %c0_4 = arith.constant 0 : index
    %3 = vector.load %arg6[%c0_3, %c0_4] : memref<1x640xf32, #tpu.memory_space<vmem>>, vector<1x640xf32>
    %4 = vector.broadcast %3 : vector<1x640xf32> to vector<16x640xf32>
    %5 = arith.addf %2, %4 : vector<16x640xf32>
    %cst_5 = arith.constant 0.000000e+00 : f32
    %6 = vector.broadcast %cst_5 : f32 to vector<16x640xf32>
    %7 = arith.maximumf %5, %6 : vector<16x640xf32>
    %8 = arith.truncf %7 : vector<16x640xf32> to vector<16x640xbf16>
    %c0_6 = arith.constant 0 : index
    %c0_7 = arith.constant 0 : index
    %9 = vector.load %arg3[%c0_6, %c0_7] : memref<640x128xbf16, #tpu.memory_space<vmem>>, vector<640x128xbf16>
    %cst_8 = arith.constant dense<0.000000e+00> : vector<16x128xf32>
    %10 = tpu.matmul %8, %9, %cst_8 {dimension_numbers = #tpu.dot_dimension_numbers<[1], [0], [0], [1], [0, 0, 1, 1], [], []>} : vector<16x640xbf16>, vector<640x128xbf16>, vector<16x128xf32> -> vector<16x128xf32>
    %cst_9 = arith.constant 0.000000e+00 : f32
    %11 = vector.broadcast %cst_9 : f32 to vector<16x128xf32>
    %12 = arith.maximumf %10, %11 : vector<16x128xf32>
    %13 = arith.truncf %12 : vector<16x128xf32> to vector<16x128xbf16>
    %c0_10 = arith.constant 0 : index
    %c0_11 = arith.constant 0 : index
    %14 = vector.load %arg4[%c0_10, %c0_11] : memref<128x128xbf16, #tpu.memory_space<vmem>>, vector<128x128xbf16>
    %cst_12 = arith.constant dense<0.000000e+00> : vector<16x128xf32>
    %15 = tpu.matmul %13, %14, %cst_12 {dimension_numbers = #tpu.dot_dimension_numbers<[1], [0], [0], [1], [0, 0, 1, 1], [], []>} : vector<16x128xbf16>, vector<128x128xbf16>, vector<16x128xf32> -> vector<16x128xf32>
    %cst_13 = arith.constant 0.000000e+00 : f32
    %16 = vector.broadcast %cst_13 : f32 to vector<16x128xf32>
    %17 = arith.maximumf %15, %16 : vector<16x128xf32>
    %18 = arith.truncf %17 : vector<16x128xf32> to vector<16x128xbf16>
    %c0_14 = arith.constant 0 : index
    %c0_15 = arith.constant 0 : index
    %19 = vector.load %arg5[%c0_14, %c0_15] : memref<128x128xbf16, #tpu.memory_space<vmem>>, vector<128x128xbf16>
    %cst_16 = arith.constant dense<0.000000e+00> : vector<16x128xf32>
    %20 = tpu.matmul %18, %19, %cst_16 {dimension_numbers = #tpu.dot_dimension_numbers<[1], [0], [0], [1], [0, 0, 1, 1], [], []>} : vector<16x128xbf16>, vector<128x128xbf16>, vector<16x128xf32> -> vector<16x128xf32>
    %c0_17 = arith.constant 0 : index
    %c0_18 = arith.constant 0 : index
    %21 = vector.load %arg7[%c0_17, %c0_18] : memref<16x128xf32, #tpu.memory_space<vmem>>, vector<16x128xf32>
    tpu.vector_store %arg7[%c0_17, %c0_18], %20 {strides = array<i32>} : memref<16x128xf32, #tpu.memory_space<vmem>>, vector<16x128xf32>,
    return
  }
  func.func @transform_0(%arg0: i32) -> (i32, i32) {
    %c0_i32 = arith.constant 0 : i32
    %c0_i32_0 = arith.constant 0 : i32
    return %arg0, %c0_i32 : i32, i32
  }
  func.func @transform_1(%arg0: i32) -> (i32, i32) {
    %c0_i32 = arith.constant 0 : i32
    %c0_i32_0 = arith.constant 0 : i32
    %c0_i32_1 = arith.constant 0 : i32
    return %c0_i32, %c0_i32_0 : i32, i32
  }
  func.func @transform_2(%arg0: i32) -> (i32, i32) {
    %c0_i32 = arith.constant 0 : i32
    %c0_i32_0 = arith.constant 0 : i32
    %c0_i32_1 = arith.constant 0 : i32
    return %c0_i32, %c0_i32_0 : i32, i32
  }
  func.func @transform_3(%arg0: i32) -> (i32, i32) {
    %c0_i32 = arith.constant 0 : i32
    %c0_i32_0 = arith.constant 0 : i32
    %c0_i32_1 = arith.constant 0 : i32
    return %c0_i32, %c0_i32_0 : i32, i32
  }
  func.func @transform_4(%arg0: i32) -> (i32, i32) {
    %c0_i32 = arith.constant 0 : i32
    %c0_i32_0 = arith.constant 0 : i32
    %c0_i32_1 = arith.constant 0 : i32
    return %c0_i32, %c0_i32_0 : i32, i32
  }
  func.func @transform_5(%arg0: i32) -> (i32, i32) {
    %c0_i32 = arith.constant 0 : i32
    %c0_i32_0 = arith.constant 0 : i32
    %c0_i32_1 = arith.constant 0 : i32
    return %c0_i32, %c0_i32_0 : i32, i32
  }
  func.func @transform_6(%arg0: i32) -> (i32, i32) {
    %c0_i32 = arith.constant 0 : i32
    %c0_i32_0 = arith.constant 0 : i32
    return %arg0, %c0_i32 : i32, i32
  }
}

</mosaic_0001>

<llo_original>
// kernel: coev_forward.1
$region0: #{coev_forward.1}
  #allocation0 [shape = 'u32[]', space=smem, size = 0x4, offset = 0x4, fixed_abs, tag = 'smem constant byte address 0x4 - core index']
  #allocation1 [shape = 'u32[72,128]{1,0:T(1,128)}', space=vmem, size = 0x9000, scoped, tag = 'internal scratch']
  %s0 = inlined_call_operand.vmem [shape: bf16[16,256], index: 0, kind: input, shape index: {}]
  %s1 = inlined_call_operand.hbm [shape: bf16[256,640], index: 1, kind: input, shape index: {}]
  %s2 = inlined_call_operand.vmem [shape: bf16[640,128], index: 2, kind: input, shape index: {}]
  %s3 = inlined_call_operand.vmem [shape: bf16[128,128], index: 3, kind: input, shape index: {}]
  %s4 = inlined_call_operand.vmem [shape: bf16[128,128], index: 4, kind: input, shape index: {}]
  %s5 = inlined_call_operand.vmem [shape: f32[1,640], index: 5, kind: input, shape index: {}]
  %s6 = inlined_call_operand.vmem [shape: f32[16,128], index: 6, kind: output, shape index: {}]
  %s7 = sld [smem:[#allocation0]]
  $region38: #{coev_forward.1} parent=0
    _
  %s9 = ssub.s32 1, %s7
  %s10 = scalar_select 0, %s9, %s7
  $region1: #{coev_forward.1} parent=0
    #allocation2 [shape = 'u8[327680]{0}', space=vmem, size = 0x50000, scoped, tag = 'input window, operand 1, single buffered']
    #allocation3 [shape = 's32[1]{0}', space=sflag, size = 0x4, scoped, tag = 'scoped memory for coev_forward.1']
    %11 = vsyncpa [#allocation3], 0
    // Predicated region
    $region2: #{coev_forward.1} parent=1 // pred_check
      _
    $region3: #{coev_forward.1} parent=1 // pred_check_branch
      %13 = sbr.rel (0) target = $region5
    $region4: #{coev_forward.1} parent=1 // pred_region
      _
    $region5: #{coev_forward.1} parent=1 // pred_fallthru
      _
    // Predicated region
    $region6: #{coev_forward.1} parent=1 // pred_check
      _
    $region7: #{coev_forward.1} parent=1 // pred_check_branch
      %15 = sbr.rel (0) target = $region9
    $region8: #{coev_forward.1} parent=1 // pred_region
      %17 = vsyncadd [#allocation3], 0
      %s18 = sshll.u32 %s1, 4
      %s19 = int_to_ptr.hbm [resolvable:$true] %s18
      %s20 = sshll.u32 [#allocation2], 4
      %s21 = int_to_ptr.vmem [resolvable:$true] %s20
      %26 = dma.hbm_to_vmem [thread:$0]  %s19, 10240, %s21, [#allocation3], 320, 320, 20
    $region9: #{coev_forward.1} parent=1 // pred_fallthru
      _
    // Predicated region
    $region10: #{coev_forward.1} parent=1 // pred_check
      _
    $region11: #{coev_forward.1} parent=1 // pred_check_branch
      %28 = sbr.rel (0) target = $region13
    $region12: #{coev_forward.1} parent=1 // pred_region
      _
    $region13: #{coev_forward.1} parent=1 // pred_fallthru
      _
    // Predicated region
    $region14: #{coev_forward.1} parent=1 // pred_check
      _
    $region15: #{coev_forward.1} parent=1 // pred_check_branch
      %30 = sbr.rel (0) target = $region17
    $region16: #{coev_forward.1} parent=1 // pred_region
      _
    $region17: #{coev_forward.1} parent=1 // pred_fallthru
      _
    // Predicated region
    $region18: #{coev_forward.1} parent=1 // pred_check
      _
    $region19: #{coev_forward.1} parent=1 // pred_check_branch
      %32 = sbr.rel (0) target = $region21
    $region20: #{coev_forward.1} parent=1 // pred_region
      _
    $region21: #{coev_forward.1} parent=1 // pred_fallthru
      _
    // Predicated region
    $region22: #{coev_forward.1} parent=1 // pred_check
      _
    $region23: #{coev_forward.1} parent=1 // pred_check_branch
      %34 = sbr.rel (0) target = $region25
    $region24: #{coev_forward.1} parent=1 // pred_region
      _
    $region25: #{coev_forward.1} parent=1 // pred_fallthru
      _
    // Predicated region
    $region26: #{coev_forward.1} parent=1 // pred_check
      _
    $region27: #{coev_forward.1} parent=1 // pred_check_branch
      %36 = sbr.rel (0) target = $region29
    $region28: #{coev_forward.1} parent=1 // pred_region
      %38 = dma.done [#allocation3], 10240
    $region29: #{coev_forward.1} parent=1 // pred_fallthru
      _
    %v39 = vld [vmem:[%s0] sm:$0xff]
    %v40 = vld [vmem:[%s0 + $0x8] sm:$0xff]
    %v41 = vld [vmem:[#allocation2] sm:$0xff]
    %v42 = vld [vmem:[#allocation2 + $0x8] sm:$0xff]
    %v43 = vld [vmem:[#allocation2 + $0x10] sm:$0xf]
    %v44 = vld [vmem:[#allocation2 + $0x14] sm:$0xff]
    %v45 = vld [vmem:[#allocation2 + $0x1c] sm:$0xff]
    %v46 = vld [vmem:[#allocation2 + $0x24] sm:$0xf]
    %v47 = vld [vmem:[#allocation2 + $0x28] sm:$0xff]
    %v48 = vld [vmem:[#allocation2 + $0x30] sm:$0xff]
    %v49 = vld [vmem:[#allocation2 + $0x38] sm:$0xf]
    %v50 = vld [vmem:[#allocation2 + $0x3c] sm:$0xff]
    %v51 = vld [vmem:[#allocation2 + $0x44] sm:$0xff]
    %v52 = vld [vmem:[#allocation2 + $0x4c] sm:$0xf]
    %v53 = vld [vmem:[#allocation2 + $0x50] sm:$0xff]
    %v54 = vld [vmem:[#allocation2 + $0x58] sm:$0xff]
    %v55 = vld [vmem:[#allocation2 + $0x60] sm:$0xf]
    %v56 = vld [vmem:[#allocation2 + $0x64] sm:$0xff]
    %v57 = vld [vmem:[#allocation2 + $0x6c] sm:$0xff]
    %v58 = vld [vmem:[#allocation2 + $0x74] sm:$0xf]
    %v59 = vld [vmem:[#allocation2 + $0x78] sm:$0xff]
    %v60 = vld [vmem:[#allocation2 + $0x80] sm:$0xff]
    %v61 = vld [vmem:[#allocation2 + $0x88] sm:$0xf]
    %v62 = vld [vmem:[#allocation2 + $0x8c] sm:$0xff]
    %v63 = vld [vmem:[#allocation2 + $0x94] sm:$0xff]
    %v64 = vld [vmem:[#allocation2 + $0x9c] sm:$0xf]
    %v65 = vld [vmem:[#allocation2 + $0xa0] sm:$0xff]
    %v66 = vld [vmem:[#allocation2 + $0xa8] sm:$0xff]
    %v67 = vld [vmem:[#allocation2 + $0xb0] sm:$0xf]
    %v68 = vld [vmem:[#allocation2 + $0xb4] sm:$0xff]
    %v69 = vld [vmem:[#allocation2 + $0xbc] sm:$0xff]
    %v70 = vld [vmem:[#allocation2 + $0xc4] sm:$0xf]
    %v71 = vld [vmem:[#allocation2 + $0xc8] sm:$0xff]
    %v72 = vld [vmem:[#allocation2 + $0xd0] sm:$0xff]
    %v73 = vld [vmem:[#allocation2 + $0xd8] sm:$0xf]
    %v74 = vld [vmem:[#allocation2 + $0xdc] sm:$0xff]
    %v75 = vld [vmem:[#allocation2 + $0xe4] sm:$0xff]
    %v76 = vld [vmem:[#allocation2 + $0xec] sm:$0xf]
    %v77 = vld [vmem:[#allocation2 + $0xf0] sm:$0xff]
    %v78 = vld [vmem:[#allocation2 + $0xf8] sm:$0xff]
    %v79 = vld [vmem:[#allocation2 + $0x100] sm:$0xf]
    %v80 = vld [vmem:[#allocation2 + $0x104] sm:$0xff]
    %v81 = vld [vmem:[#allocation2 + $0x10c] sm:$0xff]
    %v82 = vld [vmem:[#allocation2 + $0x114] sm:$0xf]
    %v83 = vld [vmem:[#allocation2 + $0x118] sm:$0xff]
    %v84 = vld [vmem:[#allocation2 + $0x120] sm:$0xff]
    %v85 = vld [vmem:[#allocation2 + $0x128] sm:$0xf]
    %v86 = vld [vmem:[#allocation2 + $0x12c] sm:$0xff]
    %v87 = vld [vmem:[#allocation2 + $0x134] sm:$0xff]
    %v88 = vld [vmem:[#allocation2 + $0x13c] sm:$0xf]
    %v89 = vld [vmem:[#allocation2 + $0x140] sm:$0xff]
    %v90 = vld [vmem:[#allocation2 + $0x148] sm:$0xff]
    %v91 = vld [vmem:[#allocation2 + $0x150] sm:$0xf]
    %v92 = vld [vmem:[#allocation2 + $0x154] sm:$0xff]
    %v93 = vld [vmem:[#allocation2 + $0x15c] sm:$0xff]
    %v94 = vld [vmem:[#allocation2 + $0x164] sm:$0xf]
    %v95 = vld [vmem:[#allocation2 + $0x168] sm:$0xff]
    %v96 = vld [vmem:[#allocation2 + $0x170] sm:$0xff]
    %v97 = vld [vmem:[#allocation2 + $0x178] sm:$0xf]
    %v98 = vld [vmem:[#allocation2 + $0x17c] sm:$0xff]
    %v99 = vld [vmem:[#allocation2 + $0x184] sm:$0xff]
    %v100 = vld [vmem:[#allocation2 + $0x18c] sm:$0xf]
    %v101 = vld [vmem:[#allocation2 + $0x190] sm:$0xff]
    %v102 = vld [vmem:[#allocation2 + $0x198] sm:$0xff]
    %v103 = vld [vmem:[#allocation2 + $0x1a0] sm:$0xf]
    %v104 = vld [vmem:[#allocation2 + $0x1a4] sm:$0xff]
    %v105 = vld [vmem:[#allocation2 + $0x1ac] sm:$0xff]
    %v106 = vld [vmem:[#allocation2 + $0x1b4] sm:$0xf]
    %v107 = vld [vmem:[#allocation2 + $0x1b8] sm:$0xff]
    %v108 = vld [vmem:[#allocation2 + $0x1c0] sm:$0xff]
    %v109 = vld [vmem:[#allocation2 + $0x1c8] sm:$0xf]
    %v110 = vld [vmem:[#allocation2 + $0x1cc] sm:$0xff]
    %v111 = vld [vmem:[#allocation2 + $0x1d4] sm:$0xff]
    %v112 = vld [vmem:[#allocation2 + $0x1dc] sm:$0xf]
    %v113 = vld [vmem:[#allocation2 + $0x1e0] sm:$0xff]
    %v114 = vld [vmem:[#allocation2 + $0x1e8] sm:$0xff]
    %v115 = vld [vmem:[#allocation2 + $0x1f0] sm:$0xf]
    %v116 = vld [vmem:[#allocation2 + $0x1f4] sm:$0xff]
    %v117 = vld [vmem:[#allocation2 + $0x1fc] sm:$0xff]
    %v118 = vld [vmem:[#allocation2 + $0x204] sm:$0xf]
    %v119 = vld [vmem:[#allocation2 + $0x208] sm:$0xff]
    %v120 = vld [vmem:[#allocation2 + $0x210] sm:$0xff]
    %v121 = vld [vmem:[#allocation2 + $0x218] sm:$0xf]
    %v122 = vld [vmem:[#allocation2 + $0x21c] sm:$0xff]
    %v123 = vld [vmem:[#allocation2 + $0x224] sm:$0xff]
    %v124 = vld [vmem:[#allocation2 + $0x22c] sm:$0xf]
    %v125 = vld [vmem:[#allocation2 + $0x230] sm:$0xff]
    %v126 = vld [vmem:[#allocation2 + $0x238] sm:$0xff]
    %v127 = vld [vmem:[#allocation2 + $0x240] sm:$0xf]
    %v128 = vld [vmem:[#allocation2 + $0x244] sm:$0xff]
    %v129 = vld [vmem:[#allocation2 + $0x24c] sm:$0xff]
    %v130 = vld [vmem:[#allocation2 + $0x254] sm:$0xf]
    %v131 = vld [vmem:[#allocation2 + $0x258] sm:$0xff]
    %v132 = vld [vmem:[#allocation2 + $0x260] sm:$0xff]
    %v133 = vld [vmem:[#allocation2 + $0x268] sm:$0xf]
    %v134 = vld [vmem:[#allocation2 + $0x26c] sm:$0xff]
    %v135 = vld [vmem:[#allocation2 + $0x274] sm:$0xff]
    %v136 = vld [vmem:[#allocation2 + $0x27c] sm:$0xf]
    %v137 = vld [vmem:[%s5] sm:$0x1f]
    %v139 = vperm.slane %v137, 0
    %v140 = vperm.slane %v137, 1
    %v141 = vperm.slane %v137, 2
    %v142 = vperm.slane %v137, 3
    %v143 = vperm.slane %v137, 4
    %v151 = vunpack.c.l.b16 %v39
    %v152 = vunpack.c.h.b16 %v39
    %v153 = vunpack.c.l.b16 %v40
    %v154 = vunpack.c.h.b16 %v40
    %v155 = vpack.c.b16 %v153, %v151
    %v156 = vpack.c.b16 %v154, %v152
    %v255 = vunpack.c.l.b16 %v41
    %v256 = vunpack.c.h.b16 %v41
    %v257 = vunpack.c.l.b16 %v42
    %v258 = vunpack.c.h.b16 %v42
    %v259 = vunpack.c.l.b16 %v43
    %v260 = vunpack.c.l.b16 %v44
    %v261 = vunpack.c.h.b16 %v44
    %v262 = vunpack.c.l.b16 %v45
    %v263 = vunpack.c.h.b16 %v45
    %v264 = vunpack.c.l.b16 %v46
    %v265 = vunpack.c.l.b16 %v47
    %v266 = vunpack.c.h.b16 %v47
    %v267 = vunpack.c.l.b16 %v48
    %v268 = vunpack.c.h.b16 %v48
    %v269 = vunpack.c.l.b16 %v49
    %v270 = vunpack.c.l.b16 %v50
    %v271 = vunpack.c.h.b16 %v50
    %v272 = vunpack.c.l.b16 %v51
    %v273 = vunpack.c.h.b16 %v51
    %v274 = vunpack.c.l.b16 %v52
    %v275 = vunpack.c.l.b16 %v53
    %v276 = vunpack.c.h.b16 %v53
    %v277 = vunpack.c.l.b16 %v54
    %v278 = vunpack.c.h.b16 %v54
    %v279 = vunpack.c.l.b16 %v55
    %v280 = vunpack.c.l.b16 %v56
    %v281 = vunpack.c.h.b16 %v56
    %v282 = vunpack.c.l.b16 %v57
    %v283 = vunpack.c.h.b16 %v57
    %v284 = vunpack.c.l.b16 %v58
    %v285 = vunpack.c.l.b16 %v59
    %v286 = vunpack.c.h.b16 %v59
    %v287 = vunpack.c.l.b16 %v60
    %v288 = vunpack.c.h.b16 %v60
    %v289 = vunpack.c.l.b16 %v61
    %v290 = vunpack.c.l.b16 %v62
    %v291 = vunpack.c.h.b16 %v62
    %v292 = vunpack.c.l.b16 %v63
    %v293 = vunpack.c.h.b16 %v63
    %v294 = vunpack.c.l.b16 %v64
    %v295 = vunpack.c.l.b16 %v65
    %v296 = vunpack.c.h.b16 %v65
    %v297 = vunpack.c.l.b16 %v66
    %v298 = vunpack.c.h.b16 %v66
    %v299 = vunpack.c.l.b16 %v67
    %v300 = vunpack.c.l.b16 %v68
    %v301 = vunpack.c.h.b16 %v68
    %v302 = vunpack.c.l.b16 %v69
    %v303 = vunpack.c.h.b16 %v69
    %v304 = vunpack.c.l.b16 %v70
    %v305 = vunpack.c.l.b16 %v71
    %v306 = vunpack.c.h.b16 %v71
    %v307 = vunpack.c.l.b16 %v72
    %v308 = vunpack.c.h.b16 %v72
    %v309 = vunpack.c.l.b16 %v73
    %v310 = vunpack.c.l.b16 %v74
    %v311 = vunpack.c.h.b16 %v74
    %v312 = vunpack.c.l.b16 %v75
    %v313 = vunpack.c.h.b16 %v75
    %v314 = vunpack.c.l.b16 %v76
    %v315 = vunpack.c.l.b16 %v77
    %v316 = vunpack.c.h.b16 %v77
    %v317 = vunpack.c.l.b16 %v78
    %v318 = vunpack.c.h.b16 %v78
    %v319 = vunpack.c.l.b16 %v79
    %v320 = vunpack.c.l.b16 %v80
    %v321 = vunpack.c.h.b16 %v80
    %v322 = vunpack.c.l.b16 %v81
    %v323 = vunpack.c.h.b16 %v81
    %v324 = vunpack.c.l.b16 %v82
    %v325 = vunpack.c.l.b16 %v83
    %v326 = vunpack.c.h.b16 %v83
    %v327 = vunpack.c.l.b16 %v84
    %v328 = vunpack.c.h.b16 %v84
    %v329 = vunpack.c.l.b16 %v85
    %v330 = vunpack.c.l.b16 %v86
    %v331 = vunpack.c.h.b16 %v86
    %v332 = vunpack.c.l.b16 %v87
    %v333 = vunpack.c.h.b16 %v87
    %v334 = vunpack.c.l.b16 %v88
    %v335 = vunpack.c.l.b16 %v89
    %v336 = vunpack.c.h.b16 %v89
    %v337 = vunpack.c.l.b16 %v90
    %v338 = vunpack.c.h.b16 %v90
    %v339 = vunpack.c.l.b16 %v91
    %v340 = vunpack.c.l.b16 %v92
    %v341 = vunpack.c.h.b16 %v92
    %v342 = vunpack.c.l.b16 %v93
    %v343 = vunpack.c.h.b16 %v93
    %v344 = vunpack.c.l.b16 %v94
    %v345 = vunpack.c.l.b16 %v95
    %v346 = vunpack.c.h.b16 %v95
    %v347 = vunpack.c.l.b16 %v96
    %v348 = vunpack.c.h.b16 %v96
    %v349 = vunpack.c.l.b16 %v97
    %v350 = vunpack.c.l.b16 %v98
    %v351 = vunpack.c.h.b16 %v98
    %v352 = vunpack.c.l.b16 %v99
    %v353 = vunpack.c.h.b16 %v99
    %v354 = vunpack.c.l.b16 %v100
    %v355 = vunpack.c.l.b16 %v101
    %v356 = vunpack.c.h.b16 %v101
    %v357 = vunpack.c.l.b16 %v102
    %v358 = vunpack.c.h.b16 %v102
    %v359 = vunpack.c.l.b16 %v103
    %v360 = vunpack.c.l.b16 %v104
    %v361 = vunpack.c.h.b16 %v104
    %v362 = vunpack.c.l.b16 %v105
    %v363 = vunpack.c.h.b16 %v105
    %v364 = vunpack.c.l.b16 %v106
    %v365 = vunpack.c.l.b16 %v107
    %v366 = vunpack.c.h.b16 %v107
    %v367 = vunpack.c.l.b16 %v108
    %v368 = vunpack.c.h.b16 %v108
    %v369 = vunpack.c.l.b16 %v109
    %v370 = vunpack.c.l.b16 %v110
    %v371 = vunpack.c.h.b16 %v110
    %v372 = vunpack.c.l.b16 %v111
    %v373 = vunpack.c.h.b16 %v111
    %v374 = vunpack.c.l.b16 %v112
    %v375 = vunpack.c.l.b16 %v113
    %v376 = vunpack.c.h.b16 %v113
    %v377 = vunpack.c.l.b16 %v114
    %v378 = vunpack.c.h.b16 %v114
    %v379 = vunpack.c.l.b16 %v115
    %v380 = vunpack.c.l.b16 %v116
    %v381 = vunpack.c.h.b16 %v116
    %v382 = vunpack.c.l.b16 %v117
    %v383 = vunpack.c.h.b16 %v117
    %v384 = vunpack.c.l.b16 %v118
    %v385 = vunpack.c.l.b16 %v119
    %v386 = vunpack.c.h.b16 %v119
    %v387 = vunpack.c.l.b16 %v120
    %v388 = vunpack.c.h.b16 %v120
    %v389 = vunpack.c.l.b16 %v121
    %v390 = vunpack.c.l.b16 %v122
    %v391 = vunpack.c.h.b16 %v122
    %v392 = vunpack.c.l.b16 %v123
    %v393 = vunpack.c.h.b16 %v123
    %v394 = vunpack.c.l.b16 %v124
    %v395 = vunpack.c.l.b16 %v125
    %v396 = vunpack.c.h.b16 %v125
    %v397 = vunpack.c.l.b16 %v126
    %v398 = vunpack.c.h.b16 %v126
    %v399 = vunpack.c.l.b16 %v127
    %v400 = vunpack.c.l.b16 %v128
    %v401 = vunpack.c.h.b16 %v128
    %v402 = vunpack.c.l.b16 %v129
    %v403 = vunpack.c.h.b16 %v129
    %v404 = vunpack.c.l.b16 %v130
    %v405 = vunpack.c.l.b16 %v131
    %v406 = vunpack.c.h.b16 %v131
    %v407 = vunpack.c.l.b16 %v132
    %v408 = vunpack.c.h.b16 %v132
    %v409 = vunpack.c.l.b16 %v133
    %v410 = vunpack.c.l.b16 %v134
    %v411 = vunpack.c.h.b16 %v134
    %v412 = vunpack.c.l.b16 %v135
    %v413 = vunpack.c.h.b16 %v135
    %v414 = vunpack.c.l.b16 %v136
    %v415 = vpack.c.b16 %v260, %v255
    %v416 = vpack.c.b16 %v261, %v256
    %v417 = vpack.c.b16 %v262, %v257
    %v418 = vpack.c.b16 %v263, %v258
    %v419 = vpack.c.b16 %v264, %v259
    %v420 = vpack.c.b16 %v270, %v265
    %v421 = vpack.c.b16 %v271, %v266
    %v422 = vpack.c.b16 %v272, %v267
    %v423 = vpack.c.b16 %v273, %v268
    %v424 = vpack.c.b16 %v274, %v269
    %v425 = vpack.c.b16 %v280, %v275
    %v426 = vpack.c.b16 %v281, %v276
    %v427 = vpack.c.b16 %v282, %v277
    %v428 = vpack.c.b16 %v283, %v278
    %v429 = vpack.c.b16 %v284, %v279
    %v430 = vpack.c.b16 %v290, %v285
    %v431 = vpack.c.b16 %v291, %v286
    %v432 = vpack.c.b16 %v292, %v287
    %v433 = vpack.c.b16 %v293, %v288
    %v434 = vpack.c.b16 %v294, %v289
    %v435 = vpack.c.b16 %v300, %v295
    %v436 = vpack.c.b16 %v301, %v296
    %v437 = vpack.c.b16 %v302, %v297
    %v438 = vpack.c.b16 %v303, %v298
    %v439 = vpack.c.b16 %v304, %v299
    %v440 = vpack.c.b16 %v310, %v305
    %v441 = vpack.c.b16 %v311, %v306
    %v442 = vpack.c.b16 %v312, %v307
    %v443 = vpack.c.b16 %v313, %v308
    %v444 = vpack.c.b16 %v314, %v309
    %v445 = vpack.c.b16 %v320, %v315
    %v446 = vpack.c.b16 %v321, %v316
    %v447 = vpack.c.b16 %v322, %v317
    %v448 = vpack.c.b16 %v323, %v318
    %v449 = vpack.c.b16 %v324, %v319
    %v450 = vpack.c.b16 %v330, %v325
    %v451 = vpack.c.b16 %v331, %v326
    %v452 = vpack.c.b16 %v332, %v327
    %v453 = vpack.c.b16 %v333, %v328
    %v454 = vpack.c.b16 %v334, %v329
    %v455 = vpack.c.b16 %v340, %v335
    %v456 = vpack.c.b16 %v341, %v336
    %v457 = vpack.c.b16 %v342, %v337
    %v458 = vpack.c.b16 %v343, %v338
    %v459 = vpack.c.b16 %v344, %v339
    %v460 = vpack.c.b16 %v350, %v345
    %v461 = vpack.c.b16 %v351, %v346
    %v462 = vpack.c.b16 %v352, %v347
    %v463 = vpack.c.b16 %v353, %v348
    %v464 = vpack.c.b16 %v354, %v349
    %v465 = vpack.c.b16 %v360, %v355
    %v466 = vpack.c.b16 %v361, %v356
    %v467 = vpack.c.b16 %v362, %v357
    %v468 = vpack.c.b16 %v363, %v358
    %v469 = vpack.c.b16 %v364, %v359
    %v470 = vpack.c.b16 %v370, %v365
    %v471 = vpack.c.b16 %v371, %v366
    %v472 = vpack.c.b16 %v372, %v367
    %v473 = vpack.c.b16 %v373, %v368
    %v474 = vpack.c.b16 %v374, %v369
    %v475 = vpack.c.b16 %v380, %v375
    %v476 = vpack.c.b16 %v381, %v376
    %v477 = vpack.c.b16 %v382, %v377
    %v478 = vpack.c.b16 %v383, %v378
    %v479 = vpack.c.b16 %v384, %v379
    %v480 = vpack.c.b16 %v390, %v385
    %v481 = vpack.c.b16 %v391, %v386
    %v482 = vpack.c.b16 %v392, %v387
    %v483 = vpack.c.b16 %v393, %v388
    %v484 = vpack.c.b16 %v394, %v389
    %v485 = vpack.c.b16 %v400, %v395
    %v486 = vpack.c.b16 %v401, %v396
    %v487 = vpack.c.b16 %v402, %v397
    %v488 = vpack.c.b16 %v403, %v398
    %v489 = vpack.c.b16 %v404, %v399
    %v490 = vpack.c.b16 %v410, %v405
    %v491 = vpack.c.b16 %v411, %v406
    %v492 = vpack.c.b16 %v412, %v407
    %v493 = vpack.c.b16 %v413, %v408
    %v494 = vpack.c.b16 %v414, %v409
    %575 = vmatpush.bf16.msra.mxu0 %v450
    %576 = vmatpush.bf16.msra.mxu0 %v445
    %577 = vmatpush.bf16.msra.mxu0 %v440
    %578 = vmatpush.bf16.msra.mxu0 %v435
    %579 = vmatpush.bf16.msra.mxu0 %v430
    %580 = vmatpush.bf16.msra.mxu0 %v425
    %581 = vmatpush.bf16.msra.mxu0 %v420
    %582 = vmatpush.bf16.msra.mxu0 %v415
    %583 = vmatmul.bf16.gmra.mxu0 %v155
    %v584 = vpop.f32.mrf.mxu0
    %v585 = vadd.f32 %v139, %v584
    %v586 = vpop.f32.mrf.mxu0
    %v587 = vadd.f32 %v139, %v586
    %588 = vdwg.mxu0
    %589 = vmatpush.bf16.msra.mxu0 %v490
    %590 = vmatpush.bf16.msra.mxu0 %v485
    %591 = vmatpush.bf16.msra.mxu0 %v480
    %592 = vmatpush.bf16.msra.mxu0 %v475
    %593 = vmatpush.bf16.msra.mxu0 %v470
    %594 = vmatpush.bf16.msra.mxu0 %v465
    %595 = vmatpush.bf16.msra.mxu0 %v460
    %596 = vmatpush.bf16.msra.mxu0 %v455
    %597 = vmatmul.bf16.gmra.mxu0 %v156
    %v598 = vpop.f32.mrf.mxu0
    %v599 = vadd.f32 %v585, %v598
    %v600 = vpop.f32.mrf.mxu0
    %v601 = vadd.f32 %v587, %v600
    %602 = vdwg.mxu0
    %603 = vmatpush.bf16.msra.mxu0 %v451
    %604 = vmatpush.bf16.msra.mxu0 %v446
    %605 = vmatpush.bf16.msra.mxu0 %v441
    %606 = vmatpush.bf16.msra.mxu0 %v436
    %607 = vmatpush.bf16.msra.mxu0 %v431
    %608 = vmatpush.bf16.msra.mxu0 %v426
    %609 = vmatpush.bf16.msra.mxu0 %v421
    %610 = vmatpush.bf16.msra.mxu0 %v416
    %611 = vmatmul.bf16.gmra.mxu0 %v155
    %v612 = vpop.f32.mrf.mxu0
    %v613 = vadd.f32 %v140, %v612
    %v614 = vpop.f32.mrf.mxu0
    %v615 = vadd.f32 %v140, %v614
    %616 = vdwg.mxu0
    %617 = vmatpush.bf16.msra.mxu0 %v491
    %618 = vmatpush.bf16.msra.mxu0 %v486
    %619 = vmatpush.bf16.msra.mxu0 %v481
    %620 = vmatpush.bf16.msra.mxu0 %v476
    %621 = vmatpush.bf16.msra.mxu0 %v471
    %622 = vmatpush.bf16.msra.mxu0 %v466
    %623 = vmatpush.bf16.msra.mxu0 %v461
    %624 = vmatpush.bf16.msra.mxu0 %v456
    %625 = vmatmul.bf16.gmra.mxu0 %v156
    %v626 = vpop.f32.mrf.mxu0
    %v627 = vadd.f32 %v613, %v626
    %v628 = vpop.f32.mrf.mxu0
    %v629 = vadd.f32 %v615, %v628
    %630 = vdwg.mxu0
    %631 = vmatpush.bf16.msra.mxu0 %v452
    %632 = vmatpush.bf16.msra.mxu0 %v447
    %633 = vmatpush.bf16.msra.mxu0 %v442
    %634 = vmatpush.bf16.msra.mxu0 %v437
    %635 = vmatpush.bf16.msra.mxu0 %v432
    %636 = vmatpush.bf16.msra.mxu0 %v427
    %637 = vmatpush.bf16.msra.mxu0 %v422
    %638 = vmatpush.bf16.msra.mxu0 %v417
    %639 = vmatmul.bf16.gmra.mxu0 %v155
    %v640 = vpop.f32.mrf.mxu0
    %v641 = vadd.f32 %v141, %v640
    %v642 = vpop.f32.mrf.mxu0
    %v643 = vadd.f32 %v141, %v642
    %644 = vdwg.mxu0
    %645 = vmatpush.bf16.msra.mxu0 %v492
    %646 = vmatpush.bf16.msra.mxu0 %v487
    %647 = vmatpush.bf16.msra.mxu0 %v482
    %648 = vmatpush.bf16.msra.mxu0 %v477
    %649 = vmatpush.bf16.msra.mxu0 %v472
    %650 = vmatpush.bf16.msra.mxu0 %v467
    %651 = vmatpush.bf16.msra.mxu0 %v462
    %652 = vmatpush.bf16.msra.mxu0 %v457
    %653 = vmatmul.bf16.gmra.mxu0 %v156
    %v654 = vpop.f32.mrf.mxu0
    %v655 = vadd.f32 %v641, %v654
    %v656 = vpop.f32.mrf.mxu0
    %v657 = vadd.f32 %v643, %v656
    %658 = vdwg.mxu0
    %659 = vmatpush.bf16.msra.mxu0 %v453
    %660 = vmatpush.bf16.msra.mxu0 %v448
    %661 = vmatpush.bf16.msra.mxu0 %v443
    %662 = vmatpush.bf16.msra.mxu0 %v438
    %663 = vmatpush.bf16.msra.mxu0 %v433
    %664 = vmatpush.bf16.msra.mxu0 %v428
    %665 = vmatpush.bf16.msra.mxu0 %v423
    %666 = vmatpush.bf16.msra.mxu0 %v418
    %667 = vmatmul.bf16.gmra.mxu0 %v155
    %v668 = vpop.f32.mrf.mxu0
    %v669 = vadd.f32 %v142, %v668
    %v670 = vpop.f32.mrf.mxu0
    %v671 = vadd.f32 %v142, %v670
    %672 = vdwg.mxu0
    %673 = vmatpush.bf16.msra.mxu0 %v493
    %674 = vmatpush.bf16.msra.mxu0 %v488
    %675 = vmatpush.bf16.msra.mxu0 %v483
    %676 = vmatpush.bf16.msra.mxu0 %v478
    %677 = vmatpush.bf16.msra.mxu0 %v473
    %678 = vmatpush.bf16.msra.mxu0 %v468
    %679 = vmatpush.bf16.msra.mxu0 %v463
    %680 = vmatpush.bf16.msra.mxu0 %v458
    %681 = vmatmul.bf16.gmra.mxu0 %v156
    %v682 = vpop.f32.mrf.mxu0
    %v683 = vadd.f32 %v669, %v682
    %v684 = vpop.f32.mrf.mxu0
    %v685 = vadd.f32 %v671, %v684
    %686 = vdwg.mxu0
    %687 = vmatpush.bf16.msra.mxu0 %v454
    %688 = vmatpush.bf16.msra.mxu0 %v449
    %689 = vmatpush.bf16.msra.mxu0 %v444
    %690 = vmatpush.bf16.msra.mxu0 %v439
    %691 = vmatpush.bf16.msra.mxu0 %v434
    %692 = vmatpush.bf16.msra.mxu0 %v429
    %693 = vmatpush.bf16.msra.mxu0 %v424
    %694 = vmatpush.bf16.msra.mxu0 %v419
    %695 = vmatmul.bf16.gmra.mxu0 %v155
    %v696 = vpop.f32.mrf.mxu0
    %v697 = vadd.f32 %v143, %v696
    %v698 = vpop.f32.mrf.mxu0
    %v699 = vadd.f32 %v143, %v698
    %700 = vdwg.mxu0
    %701 = vmatpush.bf16.msra.mxu0 %v494
    %702 = vmatpush.bf16.msra.mxu0 %v489
    %703 = vmatpush.bf16.msra.mxu0 %v484
    %704 = vmatpush.bf16.msra.mxu0 %v479
    %705 = vmatpush.bf16.msra.mxu0 %v474
    %706 = vmatpush.bf16.msra.mxu0 %v469
    %707 = vmatpush.bf16.msra.mxu0 %v464
    %708 = vmatpush.bf16.msra.mxu0 %v459
    %709 = vmatmul.bf16.gmra.mxu0 %v156
    %v710 = vpop.f32.mrf.mxu0
    %v711 = vadd.f32 %v697, %v710
    %v712 = vpop.f32.mrf.mxu0
    %v713 = vadd.f32 %v699, %v712
    %714 = vdwg.mxu0
    %v715 = vmax.f32 %v599, 0.0
    %v716 = vmax.f32 %v627, 0.0
    %v717 = vmax.f32 %v655, 0.0
    %v718 = vmax.f32 %v683, 0.0
    %v719 = vmax.f32 %v711, 0.0
    %v720 = vmax.f32 %v601, 0.0
    %v721 = vmax.f32 %v629, 0.0
    %v722 = vmax.f32 %v657, 0.0
    %v723 = vmax.f32 %v685, 0.0
    %v724 = vmax.f32 %v713, 0.0
    %v725 = vpack.c.bf16 %v720, %v715
    %v726 = vpack.c.bf16 %v721, %v716
    %v727 = vpack.c.bf16 %v722, %v717
    %v728 = vpack.c.bf16 %v723, %v718
    %v729 = vpack.c.bf16 %v724, %v719
    %v730 = vld [vmem:[%s2] sm:$0xf]
    %v731 = vld [vmem:[%s2 + $0x4] sm:$0xf]
    %v732 = vld [vmem:[%s2 + $0x8] sm:$0xf]
    %v733 = vld [vmem:[%s2 + $0xc] sm:$0xf]
    %v734 = vld [vmem:[%s2 + $0x10] sm:$0xf]
    %v735 = vld [vmem:[%s2 + $0x14] sm:$0xf]
    %v736 = vld [vmem:[%s2 + $0x18] sm:$0xf]
    %v737 = vld [vmem:[%s2 + $0x1c] sm:$0xf]
    %v738 = vld [vmem:[%s2 + $0x20] sm:$0xf]
    %v739 = vld [vmem:[%s2 + $0x24] sm:$0xf]
    %v740 = vld [vmem:[%s2 + $0x28] sm:$0xf]
    %v741 = vld [vmem:[%s2 + $0x2c] sm:$0xf]
    %v742 = vld [vmem:[%s2 + $0x30] sm:$0xf]
    %v743 = vld [vmem:[%s2 + $0x34] sm:$0xf]
    %v744 = vld [vmem:[%s2 + $0x38] sm:$0xf]
    %v745 = vld [vmem:[%s2 + $0x3c] sm:$0xf]
    %v746 = vld [vmem:[%s2 + $0x40] sm:$0xf]
    %v747 = vld [vmem:[%s2 + $0x44] sm:$0xf]
    %v748 = vld [vmem:[%s2 + $0x48] sm:$0xf]
    %v749 = vld [vmem:[%s2 + $0x4c] sm:$0xf]
    %v750 = vld [vmem:[%s2 + $0x50] sm:$0xf]
    %v751 = vld [vmem:[%s2 + $0x54] sm:$0xf]
    %v752 = vld [vmem:[%s2 + $0x58] sm:$0xf]
    %v753 = vld [vmem:[%s2 + $0x5c] sm:$0xf]
    %v754 = vld [vmem:[%s2 + $0x60] sm:$0xf]
    %v755 = vld [vmem:[%s2 + $0x64] sm:$0xf]
    %v756 = vld [vmem:[%s2 + $0x68] sm:$0xf]
    %v757 = vld [vmem:[%s2 + $0x6c] sm:$0xf]
    %v758 = vld [vmem:[%s2 + $0x70] sm:$0xf]
    %v759 = vld [vmem:[%s2 + $0x74] sm:$0xf]
    %v760 = vld [vmem:[%s2 + $0x78] sm:$0xf]
    %v761 = vld [vmem:[%s2 + $0x7c] sm:$0xf]
    %v762 = vld [vmem:[%s2 + $0x80] sm:$0xf]
    %v763 = vld [vmem:[%s2 + $0x84] sm:$0xf]
    %v764 = vld [vmem:[%s2 + $0x88] sm:$0xf]
    %v765 = vld [vmem:[%s2 + $0x8c] sm:$0xf]
    %v766 = vld [vmem:[%s2 + $0x90] sm:$0xf]
    %v767 = vld [vmem:[%s2 + $0x94] sm:$0xf]
    %v768 = vld [vmem:[%s2 + $0x98] sm:$0xf]
    %v769 = vld [vmem:[%s2 + $0x9c] sm:$0xf]
    %v770 = vld [vmem:[%s2 + $0xa0] sm:$0xf]
    %v771 = vld [vmem:[%s2 + $0xa4] sm:$0xf]
    %v772 = vld [vmem:[%s2 + $0xa8] sm:$0xf]
    %v773 = vld [vmem:[%s2 + $0xac] sm:$0xf]
    %v774 = vld [vmem:[%s2 + $0xb0] sm:$0xf]
    %v775 = vld [vmem:[%s2 + $0xb4] sm:$0xf]
    %v776 = vld [vmem:[%s2 + $0xb8] sm:$0xf]
    %v777 = vld [vmem:[%s2 + $0xbc] sm:$0xf]
    %v778 = vld [vmem:[%s2 + $0xc0] sm:$0xf]
    %v779 = vld [vmem:[%s2 + $0xc4] sm:$0xf]
    %v780 = vld [vmem:[%s2 + $0xc8] sm:$0xf]
    %v781 = vld [vmem:[%s2 + $0xcc] sm:$0xf]
    %v782 = vld [vmem:[%s2 + $0xd0] sm:$0xf]
    %v783 = vld [vmem:[%s2 + $0xd4] sm:$0xf]
    %v784 = vld [vmem:[%s2 + $0xd8] sm:$0xf]
    %v785 = vld [vmem:[%s2 + $0xdc] sm:$0xf]
    %v786 = vld [vmem:[%s2 + $0xe0] sm:$0xf]
    %v787 = vld [vmem:[%s2 + $0xe4] sm:$0xf]
    %v788 = vld [vmem:[%s2 + $0xe8] sm:$0xf]
    %v789 = vld [vmem:[%s2 + $0xec] sm:$0xf]
    %v790 = vld [vmem:[%s2 + $0xf0] sm:$0xf]
    %v791 = vld [vmem:[%s2 + $0xf4] sm:$0xf]
    %v792 = vld [vmem:[%s2 + $0xf8] sm:$0xf]
    %v793 = vld [vmem:[%s2 + $0xfc] sm:$0xf]
    %v794 = vld [vmem:[%s2 + $0x100] sm:$0xf]
    %v795 = vld [vmem:[%s2 + $0x104] sm:$0xf]
    %v796 = vld [vmem:[%s2 + $0x108] sm:$0xf]
    %v797 = vld [vmem:[%s2 + $0x10c] sm:$0xf]
    %v798 = vld [vmem:[%s2 + $0x110] sm:$0xf]
    %v799 = vld [vmem:[%s2 + $0x114] sm:$0xf]
    %v800 = vld [vmem:[%s2 + $0x118] sm:$0xf]
    %v801 = vld [vmem:[%s2 + $0x11c] sm:$0xf]
    %v802 = vld [vmem:[%s2 + $0x120] sm:$0xf]
    %v803 = vld [vmem:[%s2 + $0x124] sm:$0xf]
    %v804 = vld [vmem:[%s2 + $0x128] sm:$0xf]
    %v805 = vld [vmem:[%s2 + $0x12c] sm:$0xf]
    %v806 = vld [vmem:[%s2 + $0x130] sm:$0xf]
    %v807 = vld [vmem:[%s2 + $0x134] sm:$0xf]
    %v808 = vld [vmem:[%s2 + $0x138] sm:$0xf]
    %v809 = vld [vmem:[%s2 + $0x13c] sm:$0xf]
    %v890 = vunpack.c.l.b16 %v730
    %v891 = vunpack.c.l.b16 %v731
    %v892 = vunpack.c.l.b16 %v732
    %v893 = vunpack.c.l.b16 %v733
    %v894 = vunpack.c.l.b16 %v734
    %v895 = vunpack.c.l.b16 %v735
    %v896 = vunpack.c.l.b16 %v736
    %v897 = vunpack.c.l.b16 %v737
    %v898 = vunpack.c.l.b16 %v738
    %v899 = vunpack.c.l.b16 %v739
    %v900 = vunpack.c.l.b16 %v740
    %v901 = vunpack.c.l.b16 %v741
    %v902 = vunpack.c.l.b16 %v742
    %v903 = vunpack.c.l.b16 %v743
    %v904 = vunpack.c.l.b16 %v744
    %v905 = vunpack.c.l.b16 %v745
    %v906 = vunpack.c.l.b16 %v746
    %v907 = vunpack.c.l.b16 %v747
    %v908 = vunpack.c.l.b16 %v748
    %v909 = vunpack.c.l.b16 %v749
    %v910 = vunpack.c.l.b16 %v750
    %v911 = vunpack.c.l.b16 %v751
    %v912 = vunpack.c.l.b16 %v752
    %v913 = vunpack.c.l.b16 %v753
    %v914 = vunpack.c.l.b16 %v754
    %v915 = vunpack.c.l.b16 %v755
    %v916 = vunpack.c.l.b16 %v756
    %v917 = vunpack.c.l.b16 %v757
    %v918 = vunpack.c.l.b16 %v758
    %v919 = vunpack.c.l.b16 %v759
    %v920 = vunpack.c.l.b16 %v760
    %v921 = vunpack.c.l.b16 %v761
    %v922 = vunpack.c.l.b16 %v762
    %v923 = vunpack.c.l.b16 %v763
    %v924 = vunpack.c.l.b16 %v764
    %v925 = vunpack.c.l.b16 %v765
    %v926 = vunpack.c.l.b16 %v766
    %v927 = vunpack.c.l.b16 %v767
    %v928 = vunpack.c.l.b16 %v768
    %v929 = vunpack.c.l.b16 %v769
    %v930 = vunpack.c.l.b16 %v770
    %v931 = vunpack.c.l.b16 %v771
    %v932 = vunpack.c.l.b16 %v772
    %v933 = vunpack.c.l.b16 %v773
    %v934 = vunpack.c.l.b16 %v774
    %v935 = vunpack.c.l.b16 %v775
    %v936 = vunpack.c.l.b16 %v776
    %v937 = vunpack.c.l.b16 %v777
    %v938 = vunpack.c.l.b16 %v778
    %v939 = vunpack.c.l.b16 %v779
    %v940 = vunpack.c.l.b16 %v780
    %v941 = vunpack.c.l.b16 %v781
    %v942 = vunpack.c.l.b16 %v782
    %v943 = vunpack.c.l.b16 %v783
    %v944 = vunpack.c.l.b16 %v784
    %v945 = vunpack.c.l.b16 %v785
    %v946 = vunpack.c.l.b16 %v786
    %v947 = vunpack.c.l.b16 %v787
    %v948 = vunpack.c.l.b16 %v788
    %v949 = vunpack.c.l.b16 %v789
    %v950 = vunpack.c.l.b16 %v790
    %v951 = vunpack.c.l.b16 %v791
    %v952 = vunpack.c.l.b16 %v792
    %v953 = vunpack.c.l.b16 %v793
    %v954 = vunpack.c.l.b16 %v794
    %v955 = vunpack.c.l.b16 %v795
    %v956 = vunpack.c.l.b16 %v796
    %v957 = vunpack.c.l.b16 %v797
    %v958 = vunpack.c.l.b16 %v798
    %v959 = vunpack.c.l.b16 %v799
    %v960 = vunpack.c.l.b16 %v800
    %v961 = vunpack.c.l.b16 %v801
    %v962 = vunpack.c.l.b16 %v802
    %v963 = vunpack.c.l.b16 %v803
    %v964 = vunpack.c.l.b16 %v804
    %v965 = vunpack.c.l.b16 %v805
    %v966 = vunpack.c.l.b16 %v806
    %v967 = vunpack.c.l.b16 %v807
    %v968 = vunpack.c.l.b16 %v808
    %v969 = vunpack.c.l.b16 %v809
    %v970 = vpack.c.b16 %v891, %v890
    %v971 = vpack.c.b16 %v893, %v892
    %v972 = vpack.c.b16 %v895, %v894
    %v973 = vpack.c.b16 %v897, %v896
    %v974 = vpack.c.b16 %v899, %v898
    %v975 = vpack.c.b16 %v901, %v900
    %v976 = vpack.c.b16 %v903, %v902
    %v977 = vpack.c.b16 %v905, %v904
    %v978 = vpack.c.b16 %v907, %v906
    %v979 = vpack.c.b16 %v909, %v908
    %v980 = vpack.c.b16 %v911, %v910
    %v981 = vpack.c.b16 %v913, %v912
    %v982 = vpack.c.b16 %v915, %v914
    %v983 = vpack.c.b16 %v917, %v916
    %v984 = vpack.c.b16 %v919, %v918
    %v985 = vpack.c.b16 %v921, %v920
    %v986 = vpack.c.b16 %v923, %v922
    %v987 = vpack.c.b16 %v925, %v924
    %v988 = vpack.c.b16 %v927, %v926
    %v989 = vpack.c.b16 %v929, %v928
    %v990 = vpack.c.b16 %v931, %v930
    %v991 = vpack.c.b16 %v933, %v932
    %v992 = vpack.c.b16 %v935, %v934
    %v993 = vpack.c.b16 %v937, %v936
    %v994 = vpack.c.b16 %v939, %v938
    %v995 = vpack.c.b16 %v941, %v940
    %v996 = vpack.c.b16 %v943, %v942
    %v997 = vpack.c.b16 %v945, %v944
    %v998 = vpack.c.b16 %v947, %v946
    %v999 = vpack.c.b16 %v949, %v948
    %v1000 = vpack.c.b16 %v951, %v950
    %v1001 = vpack.c.b16 %v953, %v952
    %v1002 = vpack.c.b16 %v955, %v954
    %v1003 = vpack.c.b16 %v957, %v956
    %v1004 = vpack.c.b16 %v959, %v958
    %v1005 = vpack.c.b16 %v961, %v960
    %v1006 = vpack.c.b16 %v963, %v962
    %v1007 = vpack.c.b16 %v965, %v964
    %v1008 = vpack.c.b16 %v967, %v966
    %v1009 = vpack.c.b16 %v969, %v968
    %1050 = vmatpush.bf16.msra.mxu0 %v977
    %1051 = vmatpush.bf16.msra.mxu0 %v976
    %1052 = vmatpush.bf16.msra.mxu0 %v975
    %1053 = vmatpush.bf16.msra.mxu0 %v974
    %1054 = vmatpush.bf16.msra.mxu0 %v973
    %1055 = vmatpush.bf16.msra.mxu0 %v972
    %1056 = vmatpush.bf16.msra.mxu0 %v971
    %1057 = vmatpush.bf16.msra.mxu0 %v970
    %1058 = vmatmul.bf16.gmra.mxu0 %v725
    %v1059 = vpop.f32.mrf.mxu0
    %v1060 = vadd.f32 0.0, %v1059
    %v1061 = vpop.f32.mrf.mxu0
    %v1062 = vadd.f32 0.0, %v1061
    %1063 = vdwg.mxu0
    %1064 = vmatpush.bf16.msra.mxu0 %v985
    %1065 = vmatpush.bf16.msra.mxu0 %v984
    %1066 = vmatpush.bf16.msra.mxu0 %v983
    %1067 = vmatpush.bf16.msra.mxu0 %v982
    %1068 = vmatpush.bf16.msra.mxu0 %v981
    %1069 = vmatpush.bf16.msra.mxu0 %v980
    %1070 = vmatpush.bf16.msra.mxu0 %v979
    %1071 = vmatpush.bf16.msra.mxu0 %v978
    %1072 = vmatmul.bf16.gmra.mxu0 %v726
    %v1073 = vpop.f32.mrf.mxu0
    %v1074 = vadd.f32 %v1060, %v1073
    %v1075 = vpop.f32.mrf.mxu0
    %v1076 = vadd.f32 %v1062, %v1075
    %1077 = vdwg.mxu0
    %1078 = vmatpush.bf16.msra.mxu0 %v993
    %1079 = vmatpush.bf16.msra.mxu0 %v992
    %1080 = vmatpush.bf16.msra.mxu0 %v991
    %1081 = vmatpush.bf16.msra.mxu0 %v990
    %1082 = vmatpush.bf16.msra.mxu0 %v989
    %1083 = vmatpush.bf16.msra.mxu0 %v988
    %1084 = vmatpush.bf16.msra.mxu0 %v987
    %1085 = vmatpush.bf16.msra.mxu0 %v986
    %1086 = vmatmul.bf16.gmra.mxu0 %v727
    %v1087 = vpop.f32.mrf.mxu0
    %v1088 = vadd.f32 %v1074, %v1087
    %v1089 = vpop.f32.mrf.mxu0
    %v1090 = vadd.f32 %v1076, %v1089
    %1091 = vdwg.mxu0
    %1092 = vmatpush.bf16.msra.mxu0 %v1001
    %1093 = vmatpush.bf16.msra.mxu0 %v1000
    %1094 = vmatpush.bf16.msra.mxu0 %v999
    %1095 = vmatpush.bf16.msra.mxu0 %v998
    %1096 = vmatpush.bf16.msra.mxu0 %v997
    %1097 = vmatpush.bf16.msra.mxu0 %v996
    %1098 = vmatpush.bf16.msra.mxu0 %v995
    %1099 = vmatpush.bf16.msra.mxu0 %v994
    %1100 = vmatmul.bf16.gmra.mxu0 %v728
    %v1101 = vpop.f32.mrf.mxu0
    %v1102 = vadd.f32 %v1088, %v1101
    %v1103 = vpop.f32.mrf.mxu0
    %v1104 = vadd.f32 %v1090, %v1103
    %1105 = vdwg.mxu0
    %1106 = vmatpush.bf16.msra.mxu0 %v1009
    %1107 = vmatpush.bf16.msra.mxu0 %v1008
    %1108 = vmatpush.bf16.msra.mxu0 %v1007
    %1109 = vmatpush.bf16.msra.mxu0 %v1006
    %1110 = vmatpush.bf16.msra.mxu0 %v1005
    %1111 = vmatpush.bf16.msra.mxu0 %v1004
    %1112 = vmatpush.bf16.msra.mxu0 %v1003
    %1113 = vmatpush.bf16.msra.mxu0 %v1002
    %1114 = vmatmul.bf16.gmra.mxu0 %v729
    %v1115 = vpop.f32.mrf.mxu0
    %v1116 = vadd.f32 %v1102, %v1115
    %v1117 = vpop.f32.mrf.mxu0
    %v1118 = vadd.f32 %v1104, %v1117
    %1119 = vdwg.mxu0
    %v1120 = vmax.f32 %v1116, 0.0
    %v1121 = vmax.f32 %v1118, 0.0
    %v1122 = vpack.c.bf16 %v1121, %v1120
    %v1123 = vld [vmem:[%s3] sm:$0xf]
    %v1124 = vld [vmem:[%s3 + $0x4] sm:$0xf]
    %v1125 = vld [vmem:[%s3 + $0x8] sm:$0xf]
    %v1126 = vld [vmem:[%s3 + $0xc] sm:$0xf]
    %v1127 = vld [vmem:[%s3 + $0x10] sm:$0xf]
    %v1128 = vld [vmem:[%s3 + $0x14] sm:$0xf]
    %v1129 = vld [vmem:[%s3 + $0x18] sm:$0xf]
    %v1130 = vld [vmem:[%s3 + $0x1c] sm:$0xf]
    %v1131 = vld [vmem:[%s3 + $0x20] sm:$0xf]
    %v1132 = vld [vmem:[%s3 + $0x24] sm:$0xf]
    %v1133 = vld [vmem:[%s3 + $0x28] sm:$0xf]
    %v1134 = vld [vmem:[%s3 + $0x2c] sm:$0xf]
    %v1135 = vld [vmem:[%s3 + $0x30] sm:$0xf]
    %v1136 = vld [vmem:[%s3 + $0x34] sm:$0xf]
    %v1137 = vld [vmem:[%s3 + $0x38] sm:$0xf]
    %v1138 = vld [vmem:[%s3 + $0x3c] sm:$0xf]
    %v1155 = vunpack.c.l.b16 %v1123
    %v1156 = vunpack.c.l.b16 %v1124
    %v1157 = vunpack.c.l.b16 %v1125
    %v1158 = vunpack.c.l.b16 %v1126
    %v1159 = vunpack.c.l.b16 %v1127
    %v1160 = vunpack.c.l.b16 %v1128
    %v1161 = vunpack.c.l.b16 %v1129
    %v1162 = vunpack.c.l.b16 %v1130
    %v1163 = vunpack.c.l.b16 %v1131
    %v1164 = vunpack.c.l.b16 %v1132
    %v1165 = vunpack.c.l.b16 %v1133
    %v1166 = vunpack.c.l.b16 %v1134
    %v1167 = vunpack.c.l.b16 %v1135
    %v1168 = vunpack.c.l.b16 %v1136
    %v1169 = vunpack.c.l.b16 %v1137
    %v1170 = vunpack.c.l.b16 %v1138
    %v1171 = vpack.c.b16 %v1156, %v1155
    %v1172 = vpack.c.b16 %v1158, %v1157
    %v1173 = vpack.c.b16 %v1160, %v1159
    %v1174 = vpack.c.b16 %v1162, %v1161
    %v1175 = vpack.c.b16 %v1164, %v1163
    %v1176 = vpack.c.b16 %v1166, %v1165
    %v1177 = vpack.c.b16 %v1168, %v1167
    %v1178 = vpack.c.b16 %v1170, %v1169
    %1187 = vmatpush.bf16.msra.mxu0 %v1178
    %1188 = vmatpush.bf16.msra.mxu0 %v1177
    %1189 = vmatpush.bf16.msra.mxu0 %v1176
    %1190 = vmatpush.bf16.msra.mxu0 %v1175
    %1191 = vmatpush.bf16.msra.mxu0 %v1174
    %1192 = vmatpush.bf16.msra.mxu0 %v1173
    %1193 = vmatpush.bf16.msra.mxu0 %v1172
    %1194 = vmatpush.bf16.msra.mxu0 %v1171
    %1195 = vmatmul.bf16.gmra.mxu0 %v1122
    %v1196 = vpop.f32.mrf.mxu0
    %v1197 = vadd.f32 0.0, %v1196
    %v1198 = vpop.f32.mrf.mxu0
    %v1199 = vadd.f32 0.0, %v1198
    %1200 = vdwg.mxu0
    %v1201 = vmax.f32 %v1197, 0.0
    %v1202 = vmax.f32 %v1199, 0.0
    %v1203 = vpack.c.bf16 %v1202, %v1201
    %v1204 = vld [vmem:[%s4] sm:$0xf]
    %v1205 = vld [vmem:[%s4 + $0x4] sm:$0xf]
    %v1206 = vld [vmem:[%s4 + $0x8] sm:$0xf]
    %v1207 = vld [vmem:[%s4 + $0xc] sm:$0xf]
    %v1208 = vld [vmem:[%s4 + $0x10] sm:$0xf]
    %v1209 = vld [vmem:[%s4 + $0x14] sm:$0xf]
    %v1210 = vld [vmem:[%s4 + $0x18] sm:$0xf]
    %v1211 = vld [vmem:[%s4 + $0x1c] sm:$0xf]
    %v1212 = vld [vmem:[%s4 + $0x20] sm:$0xf]
    %v1213 = vld [vmem:[%s4 + $0x24] sm:$0xf]
    %v1214 = vld [vmem:[%s4 + $0x28] sm:$0xf]
    %v1215 = vld [vmem:[%s4 + $0x2c] sm:$0xf]
    %v1216 = vld [vmem:[%s4 + $0x30] sm:$0xf]
    %v1217 = vld [vmem:[%s4 + $0x34] sm:$0xf]
    %v1218 = vld [vmem:[%s4 + $0x38] sm:$0xf]
    %v1219 = vld [vmem:[%s4 + $0x3c] sm:$0xf]
    %v1236 = vunpack.c.l.b16 %v1204
    %v1237 = vunpack.c.l.b16 %v1205
    %v1238 = vunpack.c.l.b16 %v1206
    %v1239 = vunpack.c.l.b16 %v1207
    %v1240 = vunpack.c.l.b16 %v1208
    %v1241 = vunpack.c.l.b16 %v1209
    %v1242 = vunpack.c.l.b16 %v1210
    %v1243 = vunpack.c.l.b16 %v1211
    %v1244 = vunpack.c.l.b16 %v1212
    %v1245 = vunpack.c.l.b16 %v1213
    %v1246 = vunpack.c.l.b16 %v1214
    %v1247 = vunpack.c.l.b16 %v1215
    %v1248 = vunpack.c.l.b16 %v1216
    %v1249 = vunpack.c.l.b16 %v1217
    %v1250 = vunpack.c.l.b16 %v1218
    %v1251 = vunpack.c.l.b16 %v1219
    %v1252 = vpack.c.b16 %v1237, %v1236
    %v1253 = vpack.c.b16 %v1239, %v1238
    %v1254 = vpack.c.b16 %v1241, %v1240
    %v1255 = vpack.c.b16 %v1243, %v1242
    %v1256 = vpack.c.b16 %v1245, %v1244
    %v1257 = vpack.c.b16 %v1247, %v1246
    %v1258 = vpack.c.b16 %v1249, %v1248
    %v1259 = vpack.c.b16 %v1251, %v1250
    %1268 = vmatpush.bf16.msra.mxu0 %v1259
    %1269 = vmatpush.bf16.msra.mxu0 %v1258
    %1270 = vmatpush.bf16.msra.mxu0 %v1257
    %1271 = vmatpush.bf16.msra.mxu0 %v1256
    %1272 = vmatpush.bf16.msra.mxu0 %v1255
    %1273 = vmatpush.bf16.msra.mxu0 %v1254
    %1274 = vmatpush.bf16.msra.mxu0 %v1253
    %1275 = vmatpush.bf16.msra.mxu0 %v1252
    %1276 = vmatmul.bf16.gmra.mxu0 %v1203
    %v1277 = vpop.f32.mrf.mxu0
    %v1278 = vadd.f32 0.0, %v1277
    %v1279 = vpop.f32.mrf.mxu0
    %v1280 = vadd.f32 0.0, %v1279
    %1281 = vdwg.mxu0
    %1282 = vst [vmem:[%s6] sm:$0xff] %v1278
    %1283 = vst [vmem:[%s6 + $0x8] sm:$0xff] %v1280
    // Predicated region
    $region30: #{coev_forward.1} parent=1 // pred_check
      _
    $region31: #{coev_forward.1} parent=1 // pred_check_branch
      %1285 = sbr.rel (0) target = $region33
    $region32: #{coev_forward.1} parent=1 // pred_region
      _
    $region33: #{coev_forward.1} parent=1 // pred_fallthru
      _
    // Predicated region
    $region34: #{coev_forward.1} parent=1 // pred_check
      _
    $region35: #{coev_forward.1} parent=1 // pred_check_branch
      %1287 = sbr.rel (0) target = $region37
    $region36: #{coev_forward.1} parent=1 // pred_region
      _
    $region37: #{coev_forward.1} parent=1 // pred_fallthru
      _
    %1288 = vsyncpa [#allocation3], 1

</llo_original>
